<compile_context>
chip_gen: v5e
topology: v5e:2x2
jax: 0.10.0
libtpu: 0.0.40
codegen_flags: <defaults>
</compile_context>

<pallas_src>
import functools

import jax
import jax.numpy as jnp
from jax import lax
from jax.experimental import pallas as pl
from jax.experimental.pallas import tpu as pltpu

EPS = 1e-5
LANE = 128
SUBLANE = 8


def _round_up(x, m):
    return ((x + m - 1) // m) * m


def mlp_kernel(x_ref, w0_ref, wh_ref, g_ref, bt_ref, wo_ref, bo_ref, o_ref,
               *, hidden_layers, true_n, matmul_dtype):
    """Whole-batch MLP forward. Everything lives in VMEM (small, lane-padded).

    Refs (P = lane-padded feature sizes, N_P = sublane-padded batch):
      x_ref : (N_P, IN_P)                          (already cast to matmul_dtype)
      w0_ref: (IN_P, H_P)
      wh_ref: (L, H_P, H_P)
      g_ref : (L+1, 1, H_P)    bt_ref: (L+1, 1, H_P)   (BN gamma / beta)
      wo_ref: (H_P, OUT_P)     bo_ref: (1, OUT_P)
      o_ref : (N_P, OUT_P)
    Padded feature columns carry zero weights/gamma/beta, so they stay exactly
    zero through Linear+BN+ReLU. Padded batch rows are held at zero by
    `row_mask` so BN sums over them contribute nothing.
    """
    n_pad = x_ref.shape[0]
    inv_n = 1.0 / true_n
    need_mask = n_pad > true_n
    if need_mask:
        row_mask = (lax.broadcasted_iota(jnp.int32, (n_pad, 1), 0)
                    < true_n).astype(jnp.float32)

    def matmul(a, w):
        # Weights are pre-cast in the wrapper; only activations cast here
        # (no-op when matmul_dtype == float32). f32 accumulation on the MXU.
        return jnp.dot(a.astype(matmul_dtype), w,
                       preferred_element_type=jnp.float32)

    def bn_relu(h, gamma, beta):
        # One-pass BN stats (sum + sumsq -> mean, var); stats over true_n rows.
        s0 = jnp.sum(h, axis=0, keepdims=True)
        s1 = jnp.sum(h * h, axis=0, keepdims=True)
        mean = s0 * inv_n
        var = jnp.maximum(s1 * inv_n - mean * mean, 0.0)
        s = gamma * lax.rsqrt(var + EPS)          # EUP rsqrt; affine scale folded
        shift = beta - mean * s                   # affine bias folded
        out = jnp.maximum(h * s + shift, 0.0)     # single FMA + ReLU
        if need_mask:
            out = out * row_mask                  # keep padded rows exactly zero
        return out

    # --- input layer (pre-BN Linear bias dropped: cancelled by BN mean) ---
    h = bn_relu(matmul(x_ref[...], w0_ref[...]), g_ref[0], bt_ref[0])

    # --- hidden layers ---
    if hidden_layers <= 4:
        # Small L: full unroll, no loop overhead.
        for i in range(hidden_layers):
            h = bn_relu(matmul(h, wh_ref[i]), g_ref[i + 1], bt_ref[i + 1])
    else:
        # Large L: single loop body, bounded vreg live ranges.
        def body(i, hc):
            return bn_relu(matmul(hc, wh_ref[i]), g_ref[i + 1], bt_ref[i + 1])
        h = lax.fori_loop(0, hidden_layers, body, h)

    # --- output layer + sigmoid (logistic lowers onto the EUP slot) ---
    logits = matmul(h, wo_ref[...]) + bo_ref[...]
    o_ref[...] = jax.nn.sigmoid(logits).astype(o_ref.dtype)


def mlp_forward(x, params, hidden_layers, *, matmul_dtype=jnp.float32,
                out_dtype=jnp.float32):
    """Wrapper: pad batch/feature dims, run the kernel, slice real outputs."""
    w0, b0, wh, bh, g, bt, wo, bo = params
    del b0, bh  # pre-BatchNorm Linear biases are exactly cancelled by BN.

    n, in_f = x.shape
    hid = w0.shape[1]
    out_f = wo.shape[1]

    n_p = _round_up(n, SUBLANE)      # sublane-dense batch (stats still use n)
    in_p = _round_up(in_f, LANE)
    h_p = _round_up(hid, LANE)
    out_p = _round_up(out_f, LANE)

    # Zero-pad; pre-cast matmul operands once here (not per-iteration in-kernel).
    xp = jnp.pad(x, ((0, n_p - n), (0, in_p - in_f))).astype(matmul_dtype)
    w0p = jnp.pad(w0, ((0, in_p - in_f), (0, h_p - hid))).astype(matmul_dtype)
    whp = jnp.pad(wh, ((0, 0), (0, h_p - hid), (0, h_p - hid))).astype(matmul_dtype)
    gp = jnp.pad(g, ((0, 0), (0, 0), (0, h_p - hid)))
    btp = jnp.pad(bt, ((0, 0), (0, 0), (0, h_p - hid)))
    wop = jnp.pad(wo, ((0, h_p - hid), (0, out_p - out_f))).astype(matmul_dtype)
    bop = jnp.pad(bo, ((0, 0), (0, out_p - out_f)))

    operands = (xp, w0p, whp, gp, btp, wop, bop)

    # Advisory cost hint for XLA's scheduler.
    flops = 2 * n_p * (in_p * h_p + hidden_layers * h_p * h_p + h_p * out_p)
    transcendentals = (hidden_layers + 1) * h_p + n_p * out_p
    opnd_bytes = sum(int(a.size) * a.dtype.itemsize for a in operands)
    out_bytes = n_p * out_p * jnp.dtype(out_dtype).itemsize
    bytes_accessed = opnd_bytes + out_bytes

    # Scoped-VMEM budget: padded operands + output + live activation slabs,
    # with 2x headroom; kept within the smallest physical VMEM (v7x: 64 MiB).
    act_bytes = 6 * n_p * h_p * 4
    vmem_limit = int(min(64 * 2**20,
                         max(32 * 2**20, 2 * (opnd_bytes + out_bytes + act_bytes))))

    kernel = functools.partial(mlp_kernel, hidden_layers=hidden_layers,
                               true_n=n, matmul_dtype=matmul_dtype)
    out_padded = pl.pallas_call(
        kernel,
        out_shape=jax.ShapeDtypeStruct((n_p, out_p), out_dtype),
        in_specs=[pl.BlockSpec(memory_space=pltpu.MemorySpace.VMEM)] * len(operands),
        out_specs=pl.BlockSpec(memory_space=pltpu.MemorySpace.VMEM),
        cost_estimate=pl.CostEstimate(flops=flops,
                                      transcendentals=transcendentals,
                                      bytes_accessed=bytes_accessed),
        compiler_params=pltpu.CompilerParams(vmem_limit_bytes=vmem_limit),
    )(*operands)
    return out_padded[:n, :out_f]


def reference_forward(x, params, hidden_layers):
    """Pure-JAX reference matching PyTorch semantics (for correctness check)."""
    w0, b0, wh, bh, g, bt, wo, bo = params

    def bn_relu(h, idx):
        mean = jnp.mean(h, axis=0, keepdims=True)
        var = jnp.mean((h - mean) ** 2, axis=0, keepdims=True)
        hn = (h - mean) / jnp.sqrt(var + EPS)
        return jnp.maximum(hn * g[idx] + bt[idx], 0.0)

    h = bn_relu(x @ w0 + b0, 0)
    for i in range(hidden_layers):
        h = bn_relu(h @ wh[i] + bh[i], i + 1)
    return jax.nn.sigmoid(h @ wo + bo)


def init_params(key, in_features, hidden_features, hidden_layers, out_features):
    ks = jax.random.split(key, 8)
    scale = 0.5
    w0 = scale * jax.random.normal(ks[0], (in_features, hidden_features), jnp.float32)
    b0 = scale * jax.random.normal(ks[1], (1, hidden_features), jnp.float32)
    wh = scale * jax.random.normal(
        ks[2], (max(hidden_layers, 1), hidden_features, hidden_features), jnp.float32)
    bh = scale * jax.random.normal(
        ks[3], (max(hidden_layers, 1), 1, hidden_features), jnp.float32)
    g = 1.0 + 0.1 * jax.random.normal(
        ks[4], (hidden_layers + 1, 1, hidden_features), jnp.float32)
    bt = 0.1 * jax.random.normal(
        ks[5], (hidden_layers + 1, 1, hidden_features), jnp.float32)
    wo = scale * jax.random.normal(ks[6], (hidden_features, out_features), jnp.float32)
    bo = scale * jax.random.normal(ks[7], (1, out_features), jnp.float32)
    return (w0, b0, wh, bh, g, bt, wo, bo)


if __name__ == "__main__":
    # Small, coord->RGB style shapes: 64 (x,y) coordinates -> 3 RGB channels.
    N, IN, HIDDEN, LAYERS, OUT = 64, 2, 32, 2, 3

    key = jax.random.PRNGKey(0)
    kx, kp = jax.random.split(key)
    x = jax.random.uniform(kx, (N, IN), jnp.float32, minval=-1.0, maxval=1.0)
    params = init_params(kp, IN, HIDDEN, LAYERS, OUT)

    out = mlp_forward(x, params, LAYERS)   # default f32 path for a tight check
    out = jax.block_until_ready(out)

    ref = reference_forward(x, params, LAYERS)
    assert out.shape == (N, OUT), out.shape
    # Tolerance loosened slightly vs. bit-identical: the fused one-pass BN
    # variance and dropped (mathematically dead) pre-BN biases change rounding.
    max_err = float(jnp.max(jnp.abs(out - ref)))
    assert jnp.allclose(out, ref, atol=1e-4, rtol=1e-4), max_err

    print("KERNEL_OK")
</pallas_src>

<mosaic_0001>
module attributes {stable_mosaic.version = 11 : i64} {
  func.func @mlp_kernel(%arg0: memref<64x128xf32, #tpu.memory_space<vmem>>, %arg1: memref<128x128xf32, #tpu.memory_space<vmem>>, %arg2: memref<2x128x128xf32, #tpu.memory_space<vmem>>, %arg3: memref<3x1x128xf32, #tpu.memory_space<vmem>>, %arg4: memref<3x1x128xf32, #tpu.memory_space<vmem>>, %arg5: memref<128x128xf32, #tpu.memory_space<vmem>>, %arg6: memref<1x128xf32, #tpu.memory_space<vmem>>, %arg7: memref<64x128xf32, #tpu.memory_space<vmem>>) attributes {dimension_semantics = [], scalar_prefetch = 0 : i64, scratch_operands = 0 : i64, tpu.core_type = #tpu.core_type<tc>} {
    %c0 = arith.constant 0 : index
    %c0_0 = arith.constant 0 : index
    %0 = vector.load %arg0[%c0, %c0_0] : memref<64x128xf32, #tpu.memory_space<vmem>>, vector<64x128xf32>
    %c0_1 = arith.constant 0 : index
    %c0_2 = arith.constant 0 : index
    %1 = vector.load %arg1[%c0_1, %c0_2] : memref<128x128xf32, #tpu.memory_space<vmem>>, vector<128x128xf32>
    %cst = arith.constant dense<0.000000e+00> : vector<64x128xf32>
    %2 = tpu.matmul %0, %1, %cst {dimension_numbers = #tpu.dot_dimension_numbers<[1], [0], [0], [1], [0, 0, 1, 1], [], []>} : vector<64x128xf32>, vector<128x128xf32>, vector<64x128xf32> -> vector<64x128xf32>
    %c0_3 = arith.constant 0 : index
    %c0_4 = arith.constant 0 : index
    %c0_5 = arith.constant 0 : index
    %3 = vector.load %arg3[%c0_3, %c0_4, %c0_5] : memref<3x1x128xf32, #tpu.memory_space<vmem>>, vector<1x1x128xf32>
    %4 = vector.shape_cast %3 : vector<1x1x128xf32> to vector<1x128xf32>
    %c0_6 = arith.constant 0 : index
    %c0_7 = arith.constant 0 : index
    %c0_8 = arith.constant 0 : index
    %5 = vector.load %arg4[%c0_6, %c0_7, %c0_8] : memref<3x1x128xf32, #tpu.memory_space<vmem>>, vector<1x1x128xf32>
    %6 = vector.shape_cast %5 : vector<1x1x128xf32> to vector<1x128xf32>
    %cst_9 = arith.constant dense<0.000000e+00> : vector<128xf32>
    %7 = vector.multi_reduction <add>, %2, %cst_9 [0] : vector<64x128xf32> to vector<128xf32>
    %8 = vector.shape_cast %7 : vector<128xf32> to vector<1x128xf32>
    %9 = arith.mulf %2, %2 : vector<64x128xf32>
    %cst_10 = arith.constant dense<0.000000e+00> : vector<128xf32>
    %10 = vector.multi_reduction <add>, %9, %cst_10 [0] : vector<64x128xf32> to vector<128xf32>
    %11 = vector.shape_cast %10 : vector<128xf32> to vector<1x128xf32>
    %cst_11 = arith.constant 1.562500e-02 : f32
    %12 = vector.broadcast %cst_11 : f32 to vector<1x128xf32>
    %13 = arith.mulf %8, %12 : vector<1x128xf32>
    %cst_12 = arith.constant 1.562500e-02 : f32
    %14 = vector.broadcast %cst_12 : f32 to vector<1x128xf32>
    %15 = arith.mulf %11, %14 : vector<1x128xf32>
    %16 = arith.mulf %13, %13 : vector<1x128xf32>
    %17 = arith.subf %15, %16 : vector<1x128xf32>
    %cst_13 = arith.constant 0.000000e+00 : f32
    %18 = vector.broadcast %cst_13 : f32 to vector<1x128xf32>
    %19 = arith.maximumf %17, %18 : vector<1x128xf32>
    %cst_14 = arith.constant 9.99999974E-6 : f32
    %20 = vector.broadcast %cst_14 : f32 to vector<1x128xf32>
    %21 = arith.addf %19, %20 : vector<1x128xf32>
    %22 = math.rsqrt %21 : vector<1x128xf32>
    %23 = arith.mulf %4, %22 : vector<1x128xf32>
    %24 = arith.mulf %13, %23 : vector<1x128xf32>
    %25 = arith.subf %6, %24 : vector<1x128xf32>
    %26 = vector.broadcast %23 : vector<1x128xf32> to vector<64x128xf32>
    %27 = arith.mulf %2, %26 : vector<64x128xf32>
    %28 = vector.broadcast %25 : vector<1x128xf32> to vector<64x128xf32>
    %29 = arith.addf %27, %28 : vector<64x128xf32>
    %cst_15 = arith.constant 0.000000e+00 : f32
    %30 = vector.broadcast %cst_15 : f32 to vector<64x128xf32>
    %31 = arith.maximumf %29, %30 : vector<64x128xf32>
    %c0_16 = arith.constant 0 : index
    %c0_17 = arith.constant 0 : index
    %c0_18 = arith.constant 0 : index
    %32 = vector.load %arg2[%c0_16, %c0_17, %c0_18] : memref<2x128x128xf32, #tpu.memory_space<vmem>>, vector<1x128x128xf32>
    %33 = vector.shape_cast %32 : vector<1x128x128xf32> to vector<128x128xf32>
    %cst_19 = arith.constant dense<0.000000e+00> : vector<64x128xf32>
    %34 = tpu.matmul %31, %33, %cst_19 {dimension_numbers = #tpu.dot_dimension_numbers<[1], [0], [0], [1], [0, 0, 1, 1], [], []>} : vector<64x128xf32>, vector<128x128xf32>, vector<64x128xf32> -> vector<64x128xf32>
    %c1 = arith.constant 1 : index
    %c0_20 = arith.constant 0 : index
    %c0_21 = arith.constant 0 : index
    %35 = vector.load %arg3[%c1, %c0_20, %c0_21] : memref<3x1x128xf32, #tpu.memory_space<vmem>>, vector<1x1x128xf32>
    %36 = vector.shape_cast %35 : vector<1x1x128xf32> to vector<1x128xf32>
    %c1_22 = arith.constant 1 : index
    %c0_23 = arith.constant 0 : index
    %c0_24 = arith.constant 0 : index
    %37 = vector.load %arg4[%c1_22, %c0_23, %c0_24] : memref<3x1x128xf32, #tpu.memory_space<vmem>>, vector<1x1x128xf32>
    %38 = vector.shape_cast %37 : vector<1x1x128xf32> to vector<1x128xf32>
    %cst_25 = arith.constant dense<0.000000e+00> : vector<128xf32>
    %39 = vector.multi_reduction <add>, %34, %cst_25 [0] : vector<64x128xf32> to vector<128xf32>
    %40 = vector.shape_cast %39 : vector<128xf32> to vector<1x128xf32>
    %41 = arith.mulf %34, %34 : vector<64x128xf32>
    %cst_26 = arith.constant dense<0.000000e+00> : vector<128xf32>
    %42 = vector.multi_reduction <add>, %41, %cst_26 [0] : vector<64x128xf32> to vector<128xf32>
    %43 = vector.shape_cast %42 : vector<128xf32> to vector<1x128xf32>
    %cst_27 = arith.constant 1.562500e-02 : f32
    %44 = vector.broadcast %cst_27 : f32 to vector<1x128xf32>
    %45 = arith.mulf %40, %44 : vector<1x128xf32>
    %cst_28 = arith.constant 1.562500e-02 : f32
    %46 = vector.broadcast %cst_28 : f32 to vector<1x128xf32>
    %47 = arith.mulf %43, %46 : vector<1x128xf32>
    %48 = arith.mulf %45, %45 : vector<1x128xf32>
    %49 = arith.subf %47, %48 : vector<1x128xf32>
    %cst_29 = arith.constant 0.000000e+00 : f32
    %50 = vector.broadcast %cst_29 : f32 to vector<1x128xf32>
    %51 = arith.maximumf %49, %50 : vector<1x128xf32>
    %cst_30 = arith.constant 9.99999974E-6 : f32
    %52 = vector.broadcast %cst_30 : f32 to vector<1x128xf32>
    %53 = arith.addf %51, %52 : vector<1x128xf32>
    %54 = math.rsqrt %53 : vector<1x128xf32>
    %55 = arith.mulf %36, %54 : vector<1x128xf32>
    %56 = arith.mulf %45, %55 : vector<1x128xf32>
    %57 = arith.subf %38, %56 : vector<1x128xf32>
    %58 = vector.broadcast %55 : vector<1x128xf32> to vector<64x128xf32>
    %59 = arith.mulf %34, %58 : vector<64x128xf32>
    %60 = vector.broadcast %57 : vector<1x128xf32> to vector<64x128xf32>
    %61 = arith.addf %59, %60 : vector<64x128xf32>
    %cst_31 = arith.constant 0.000000e+00 : f32
    %62 = vector.broadcast %cst_31 : f32 to vector<64x128xf32>
    %63 = arith.maximumf %61, %62 : vector<64x128xf32>
    %c1_32 = arith.constant 1 : index
    %c0_33 = arith.constant 0 : index
    %c0_34 = arith.constant 0 : index
    %64 = vector.load %arg2[%c1_32, %c0_33, %c0_34] : memref<2x128x128xf32, #tpu.memory_space<vmem>>, vector<1x128x128xf32>
    %65 = vector.shape_cast %64 : vector<1x128x128xf32> to vector<128x128xf32>
    %cst_35 = arith.constant dense<0.000000e+00> : vector<64x128xf32>
    %66 = tpu.matmul %63, %65, %cst_35 {dimension_numbers = #tpu.dot_dimension_numbers<[1], [0], [0], [1], [0, 0, 1, 1], [], []>} : vector<64x128xf32>, vector<128x128xf32>, vector<64x128xf32> -> vector<64x128xf32>
    %c2 = arith.constant 2 : index
    %c0_36 = arith.constant 0 : index
    %c0_37 = arith.constant 0 : index
    %67 = vector.load %arg3[%c2, %c0_36, %c0_37] : memref<3x1x128xf32, #tpu.memory_space<vmem>>, vector<1x1x128xf32>
    %68 = vector.shape_cast %67 : vector<1x1x128xf32> to vector<1x128xf32>
    %c2_38 = arith.constant 2 : index
    %c0_39 = arith.constant 0 : index
    %c0_40 = arith.constant 0 : index
    %69 = vector.load %arg4[%c2_38, %c0_39, %c0_40] : memref<3x1x128xf32, #tpu.memory_space<vmem>>, vector<1x1x128xf32>
    %70 = vector.shape_cast %69 : vector<1x1x128xf32> to vector<1x128xf32>
    %cst_41 = arith.constant dense<0.000000e+00> : vector<128xf32>
    %71 = vector.multi_reduction <add>, %66, %cst_41 [0] : vector<64x128xf32> to vector<128xf32>
    %72 = vector.shape_cast %71 : vector<128xf32> to vector<1x128xf32>
    %73 = arith.mulf %66, %66 : vector<64x128xf32>
    %cst_42 = arith.constant dense<0.000000e+00> : vector<128xf32>
    %74 = vector.multi_reduction <add>, %73, %cst_42 [0] : vector<64x128xf32> to vector<128xf32>
    %75 = vector.shape_cast %74 : vector<128xf32> to vector<1x128xf32>
    %cst_43 = arith.constant 1.562500e-02 : f32
    %76 = vector.broadcast %cst_43 : f32 to vector<1x128xf32>
    %77 = arith.mulf %72, %76 : vector<1x128xf32>
    %cst_44 = arith.constant 1.562500e-02 : f32
    %78 = vector.broadcast %cst_44 : f32 to vector<1x128xf32>
    %79 = arith.mulf %75, %78 : vector<1x128xf32>
    %80 = arith.mulf %77, %77 : vector<1x128xf32>
    %81 = arith.subf %79, %80 : vector<1x128xf32>
    %cst_45 = arith.constant 0.000000e+00 : f32
    %82 = vector.broadcast %cst_45 : f32 to vector<1x128xf32>
    %83 = arith.maximumf %81, %82 : vector<1x128xf32>
    %cst_46 = arith.constant 9.99999974E-6 : f32
    %84 = vector.broadcast %cst_46 : f32 to vector<1x128xf32>
    %85 = arith.addf %83, %84 : vector<1x128xf32>
    %86 = math.rsqrt %85 : vector<1x128xf32>
    %87 = arith.mulf %68, %86 : vector<1x128xf32>
    %88 = arith.mulf %77, %87 : vector<1x128xf32>
    %89 = arith.subf %70, %88 : vector<1x128xf32>
    %90 = vector.broadcast %87 : vector<1x128xf32> to vector<64x128xf32>
    %91 = arith.mulf %66, %90 : vector<64x128xf32>
    %92 = vector.broadcast %89 : vector<1x128xf32> to vector<64x128xf32>
    %93 = arith.addf %91, %92 : vector<64x128xf32>
    %cst_47 = arith.constant 0.000000e+00 : f32
    %94 = vector.broadcast %cst_47 : f32 to vector<64x128xf32>
    %95 = arith.maximumf %93, %94 : vector<64x128xf32>
    %c0_48 = arith.constant 0 : index
    %c0_49 = arith.constant 0 : index
    %96 = vector.load %arg5[%c0_48, %c0_49] : memref<128x128xf32, #tpu.memory_space<vmem>>, vector<128x128xf32>
    %cst_50 = arith.constant dense<0.000000e+00> : vector<64x128xf32>
    %97 = tpu.matmul %95, %96, %cst_50 {dimension_numbers = #tpu.dot_dimension_numbers<[1], [0], [0], [1], [0, 0, 1, 1], [], []>} : vector<64x128xf32>, vector<128x128xf32>, vector<64x128xf32> -> vector<64x128xf32>
    %c0_51 = arith.constant 0 : index
    %c0_52 = arith.constant 0 : index
    %98 = vector.load %arg6[%c0_51, %c0_52] : memref<1x128xf32, #tpu.memory_space<vmem>>, vector<1x128xf32>
    %99 = vector.broadcast %98 : vector<1x128xf32> to vector<64x128xf32>
    %100 = arith.addf %97, %99 : vector<64x128xf32>
    %101 = arith.negf %100 : vector<64x128xf32>
    %102 = math.exp %101 : vector<64x128xf32>
    %cst_53 = arith.constant 1.000000e+00 : f32
    %103 = vector.broadcast %cst_53 : f32 to vector<64x128xf32>
    %104 = arith.addf %103, %102 : vector<64x128xf32>
    %105 = arith.divf %103, %104 : vector<64x128xf32>
    %c0_54 = arith.constant 0 : index
    %c0_55 = arith.constant 0 : index
    %106 = vector.load %arg7[%c0_54, %c0_55] : memref<64x128xf32, #tpu.memory_space<vmem>>, vector<64x128xf32>
    tpu.vector_store %arg7[%c0_54, %c0_55], %105 {strides = array<i32>} : memref<64x128xf32, #tpu.memory_space<vmem>>, vector<64x128xf32>,
    return
  }
}

</mosaic_0001>

<llo_original>
// kernel: tpu_custom_call.1
$region0: #{tpu_custom_call.1}
  #allocation0 [shape = 'u32[]', space=smem, size = 0x4, offset = 0x4, fixed_abs, tag = 'smem constant byte address 0x4 - core index']
  #allocation1 [shape = 'u32[72,128]{1,0:T(1,128)}', space=vmem, size = 0x9000, scoped, tag = 'internal scratch']
  %s0 = inlined_call_operand.hbm [shape: f32[64,128], index: 0, kind: input, shape index: {}]
  %s1 = inlined_call_operand.hbm [shape: f32[128,128], index: 1, kind: input, shape index: {}]
  %s2 = inlined_call_operand.hbm [shape: f32[2,128,128], index: 2, kind: input, shape index: {}]
  %s3 = inlined_call_operand.hbm [shape: f32[3,1,128], index: 3, kind: input, shape index: {}]
  %s4 = inlined_call_operand.vmem [shape: f32[3,1,128], index: 4, kind: input, shape index: {}]
  %s5 = inlined_call_operand.hbm [shape: f32[128,128], index: 5, kind: input, shape index: {}]
  %s6 = inlined_call_operand.vmem [shape: f32[1,128], index: 6, kind: input, shape index: {}]
  %s7 = inlined_call_operand.hbm [shape: f32[64,128], index: 7, kind: output, shape index: {}]
  %s8 = sld [smem:[#allocation0]]
  $region58: #{tpu_custom_call.1} parent=0
    _
  %s10 = ssub.s32 1, %s8
  %s11 = scalar_select 0, %s10, %s8
  $region1: #{tpu_custom_call.1} parent=0
    #allocation2 [shape = 'u8[32768]{0}', space=vmem, size = 0x8000, scoped, tag = 'input window, operand 0, single buffered']
    #allocation3 [shape = 's32[1]{0}', space=sflag, size = 0x4, scoped, tag = 'scoped memory for tpu_custom_call.1']
    #allocation4 [shape = 's32[1]{0}', space=sflag, size = 0x4, scoped, tag = 'scoped memory for tpu_custom_call.1']
    #allocation5 [shape = 'u8[65536]{0}', space=vmem, size = 0x10000, scoped, tag = 'input window, operand 1, single buffered']
    #allocation6 [shape = 's32[1]{0}', space=sflag, size = 0x4, scoped, tag = 'scoped memory for tpu_custom_call.1']
    #allocation7 [shape = 'u8[131072]{0}', space=vmem, size = 0x20000, scoped, tag = 'input window, operand 2, single buffered']
    #allocation8 [shape = 'u8[1536]{0}', space=vmem, size = 0x800, scoped, tag = 'input window, operand 3, single buffered']
    #allocation9 [shape = 's32[1]{0}', space=sflag, size = 0x4, scoped, tag = 'scoped memory for tpu_custom_call.1']
    #allocation10 [shape = 'u8[65536]{0}', space=vmem, size = 0x10000, scoped, tag = 'input window, operand 5, single buffered']
    #allocation11 [shape = 'u8[32768]{0}', space=vmem, size = 0x8000, scoped, tag = 'output window, operand 0, single buffered']
    %12 = vsyncpa [#allocation3], 0
    %13 = vsyncpa [#allocation6], 0
    %14 = vsyncpa [#allocation9], 0
    %15 = vsyncpa [#allocation4], 0
    // Predicated region
    $region2: #{tpu_custom_call.1} parent=1 // pred_check
      _
    $region3: #{tpu_custom_call.1} parent=1 // pred_check_branch
      %17 = sbr.rel (0) target = $region5
    $region4: #{tpu_custom_call.1} parent=1 // pred_region
      %19 = vsyncadd [#allocation3], 0
      %s20 = sshll.u32 %s0, 4
      %s21 = int_to_ptr.hbm [resolvable:$true] %s20
      %s22 = sshll.u32 [#allocation2], 4
      %s23 = int_to_ptr.vmem [resolvable:$true] %s22
      %28 = dma.hbm_to_vmem [thread:$0]  %s21, 1024, %s23, [#allocation3], 128, 128, 8
    $region5: #{tpu_custom_call.1} parent=1 // pred_fallthru
      _
    // Predicated region
    $region6: #{tpu_custom_call.1} parent=1 // pred_check
      _
    $region7: #{tpu_custom_call.1} parent=1 // pred_check_branch
      %30 = sbr.rel (0) target = $region9
    $region8: #{tpu_custom_call.1} parent=1 // pred_region
      %32 = vsyncadd [#allocation6], 0
      %s33 = sshll.u32 %s1, 4
      %s34 = int_to_ptr.hbm [resolvable:$true] %s33
      %s35 = sshll.u32 [#allocation5], 4
      %s36 = int_to_ptr.vmem [resolvable:$true] %s35
      %41 = dma.hbm_to_vmem [thread:$0]  %s34, 2048, %s36, [#allocation6], 128, 128, 8
    $region9: #{tpu_custom_call.1} parent=1 // pred_fallthru
      _
    // Predicated region
    $region10: #{tpu_custom_call.1} parent=1 // pred_check
      _
    $region11: #{tpu_custom_call.1} parent=1 // pred_check_branch
      %43 = sbr.rel (0) target = $region13
    $region12: #{tpu_custom_call.1} parent=1 // pred_region
      %45 = vsyncadd [#allocation6], 0
      %s46 = sshll.u32 %s2, 4
      %s47 = int_to_ptr.hbm [resolvable:$true] %s46
      %s48 = sshll.u32 [#allocation7], 4
      %s49 = int_to_ptr.vmem [resolvable:$true] %s48
      %54 = dma.hbm_to_vmem [thread:$0]  %s47, 4096, %s49, [#allocation6], 128, 128, 8
    $region13: #{tpu_custom_call.1} parent=1 // pred_fallthru
      _
    // Predicated region
    $region14: #{tpu_custom_call.1} parent=1 // pred_check
      _
    $region15: #{tpu_custom_call.1} parent=1 // pred_check_branch
      %56 = sbr.rel (0) target = $region17
    $region16: #{tpu_custom_call.1} parent=1 // pred_region
      %58 = vsyncadd [#allocation9], 0
      %s59 = sshll.u32 %s3, 4
      %s60 = int_to_ptr.hbm [resolvable:$true] %s59
      %s61 = sshll.u32 [#allocation8], 4
      %s62 = int_to_ptr.vmem [resolvable:$true] %s61
      %67 = dma.hbm_to_vmem [thread:$0]  %s60, 48, %s62, [#allocation9], 16, 16, 1
    $region17: #{tpu_custom_call.1} parent=1 // pred_fallthru
      _
    // Predicated region
    $region18: #{tpu_custom_call.1} parent=1 // pred_check
      _
    $region19: #{tpu_custom_call.1} parent=1 // pred_check_branch
      %69 = sbr.rel (0) target = $region21
    $region20: #{tpu_custom_call.1} parent=1 // pred_region
      _
    $region21: #{tpu_custom_call.1} parent=1 // pred_fallthru
      _
    // Predicated region
    $region22: #{tpu_custom_call.1} parent=1 // pred_check
      _
    $region23: #{tpu_custom_call.1} parent=1 // pred_check_branch
      %71 = sbr.rel (0) target = $region25
    $region24: #{tpu_custom_call.1} parent=1 // pred_region
      %73 = vsyncadd [#allocation9], 0
      %s74 = sshll.u32 %s5, 4
      %s75 = int_to_ptr.hbm [resolvable:$true] %s74
      %s76 = sshll.u32 [#allocation10], 4
      %s77 = int_to_ptr.vmem [resolvable:$true] %s76
      %82 = dma.hbm_to_vmem [thread:$0]  %s75, 2048, %s77, [#allocation9], 128, 128, 8
    $region25: #{tpu_custom_call.1} parent=1 // pred_fallthru
      _
    // Predicated region
    $region26: #{tpu_custom_call.1} parent=1 // pred_check
      _
    $region27: #{tpu_custom_call.1} parent=1 // pred_check_branch
      %84 = sbr.rel (0) target = $region29
    $region28: #{tpu_custom_call.1} parent=1 // pred_region
      _
    $region29: #{tpu_custom_call.1} parent=1 // pred_fallthru
      _
    // Predicated region
    $region30: #{tpu_custom_call.1} parent=1 // pred_check
      _
    $region31: #{tpu_custom_call.1} parent=1 // pred_check_branch
      %86 = sbr.rel (0) target = $region33
    $region32: #{tpu_custom_call.1} parent=1 // pred_region
      %88 = dma.done [#allocation3], 1024
    $region33: #{tpu_custom_call.1} parent=1 // pred_fallthru
      _
    // Predicated region
    $region34: #{tpu_custom_call.1} parent=1 // pred_check
      _
    $region35: #{tpu_custom_call.1} parent=1 // pred_check_branch
      %90 = sbr.rel (0) target = $region37
    $region36: #{tpu_custom_call.1} parent=1 // pred_region
      %92 = dma.done [#allocation6], 2048
    $region37: #{tpu_custom_call.1} parent=1 // pred_fallthru
      _
    // Predicated region
    $region38: #{tpu_custom_call.1} parent=1 // pred_check
      _
    $region39: #{tpu_custom_call.1} parent=1 // pred_check_branch
      %94 = sbr.rel (0) target = $region41
    $region40: #{tpu_custom_call.1} parent=1 // pred_region
      %96 = dma.done [#allocation6], 4096
    $region41: #{tpu_custom_call.1} parent=1 // pred_fallthru
      _
    // Predicated region
    $region42: #{tpu_custom_call.1} parent=1 // pred_check
      _
    $region43: #{tpu_custom_call.1} parent=1 // pred_check_branch
      %98 = sbr.rel (0) target = $region45
    $region44: #{tpu_custom_call.1} parent=1 // pred_region
      %100 = dma.done [#allocation9], 48
    $region45: #{tpu_custom_call.1} parent=1 // pred_fallthru
      _
    // Predicated region
    $region46: #{tpu_custom_call.1} parent=1 // pred_check
      _
    $region47: #{tpu_custom_call.1} parent=1 // pred_check_branch
      %102 = sbr.rel (0) target = $region49
    $region48: #{tpu_custom_call.1} parent=1 // pred_region
      %104 = dma.done [#allocation9], 2048
    $region49: #{tpu_custom_call.1} parent=1 // pred_fallthru
      _
    %v105 = vld [vmem:[#allocation2] sm:$0xff]
    %v106 = vld [vmem:[#allocation2 + $0x8] sm:$0xff]
    %v107 = vld [vmem:[#allocation2 + $0x10] sm:$0xff]
    %v108 = vld [vmem:[#allocation2 + $0x18] sm:$0xff]
    %v109 = vld [vmem:[#allocation2 + $0x20] sm:$0xff]
    %v110 = vld [vmem:[#allocation2 + $0x28] sm:$0xff]
    %v111 = vld [vmem:[#allocation2 + $0x30] sm:$0xff]
    %v112 = vld [vmem:[#allocation2 + $0x38] sm:$0xff]
    %v113 = vld [vmem:[#allocation5] sm:$0xff]
    %v114 = vld [vmem:[#allocation5 + $0x8] sm:$0xff]
    %v115 = vld [vmem:[#allocation5 + $0x10] sm:$0xff]
    %v116 = vld [vmem:[#allocation5 + $0x18] sm:$0xff]
    %v117 = vld [vmem:[#allocation5 + $0x20] sm:$0xff]
    %v118 = vld [vmem:[#allocation5 + $0x28] sm:$0xff]
    %v119 = vld [vmem:[#allocation5 + $0x30] sm:$0xff]
    %v120 = vld [vmem:[#allocation5 + $0x38] sm:$0xff]
    %v121 = vld [vmem:[#allocation5 + $0x40] sm:$0xff]
    %v122 = vld [vmem:[#allocation5 + $0x48] sm:$0xff]
    %v123 = vld [vmem:[#allocation5 + $0x50] sm:$0xff]
    %v124 = vld [vmem:[#allocation5 + $0x58] sm:$0xff]
    %v125 = vld [vmem:[#allocation5 + $0x60] sm:$0xff]
    %v126 = vld [vmem:[#allocation5 + $0x68] sm:$0xff]
    %v127 = vld [vmem:[#allocation5 + $0x70] sm:$0xff]
    %v128 = vld [vmem:[#allocation5 + $0x78] sm:$0xff]
    %129 = vmatpush.msra.mxu0 %v128
    %130 = vmatpush.msra.mxu0 %v127
    %131 = vmatpush.msra.mxu0 %v126
    %132 = vmatpush.msra.mxu0 %v125
    %133 = vmatpush.msra.mxu0 %v124
    %134 = vmatpush.msra.mxu0 %v123
    %135 = vmatpush.msra.mxu0 %v122
    %136 = vmatpush.msra.mxu0 %v121
    %137 = vmatpush.msra.mxu0 %v120
    %138 = vmatpush.msra.mxu0 %v119
    %139 = vmatpush.msra.mxu0 %v118
    %140 = vmatpush.msra.mxu0 %v117
    %141 = vmatpush.msra.mxu0 %v116
    %142 = vmatpush.msra.mxu0 %v115
    %143 = vmatpush.msra.mxu0 %v114
    %144 = vmatpush.msra.mxu0 %v113
    %145 = vmatmul.f32.gmra.mxu0 %v105
    %v146 = vpop.f32.mrf.mxu0
    %v147 = vadd.f32 0.0, %v146
    %148 = vmatmul.f32.gmra.mxu0 %v106
    %v149 = vpop.f32.mrf.mxu0
    %v150 = vadd.f32 0.0, %v149
    %151 = vmatmul.f32.gmra.mxu0 %v107
    %v152 = vpop.f32.mrf.mxu0
    %v153 = vadd.f32 0.0, %v152
    %154 = vmatmul.f32.gmra.mxu0 %v108
    %v155 = vpop.f32.mrf.mxu0
    %v156 = vadd.f32 0.0, %v155
    %157 = vmatmul.f32.gmra.mxu0 %v109
    %v158 = vpop.f32.mrf.mxu0
    %v159 = vadd.f32 0.0, %v158
    %160 = vmatmul.f32.gmra.mxu0 %v110
    %v161 = vpop.f32.mrf.mxu0
    %v162 = vadd.f32 0.0, %v161
    %163 = vmatmul.f32.gmra.mxu0 %v111
    %v164 = vpop.f32.mrf.mxu0
    %v165 = vadd.f32 0.0, %v164
    %166 = vmatmul.f32.gmra.mxu0 %v112
    %v167 = vpop.f32.mrf.mxu0
    %v168 = vadd.f32 0.0, %v167
    %169 = vdwg.mxu0
    %v170 = vld [vmem:[#allocation8] sm:$0x1]
    %v171 = vld [vmem:[%s4] sm:$0x1]
    %v172 = vadd.f32 %v147, %v150
    %v173 = vadd.f32 %v172, %v153
    %v174 = vadd.f32 %v173, %v156
    %v175 = vadd.f32 %v174, %v159
    %v176 = vadd.f32 %v175, %v162
    %v177 = vadd.f32 %v176, %v165
    %v178 = vadd.f32 %v177, %v168
    %v179 = vrot.slane %v178, 4
    %v180 = vadd.f32 %v178, %v179
    %v181 = vrot.slane %v180, 2
    %v182 = vadd.f32 %v180, %v181
    %v183 = vrot.slane %v182, 1
    %v184 = vadd.f32 %v182, %v183
    %v185 = vmul.f32 %v147, %v147
    %v186 = vmul.f32 %v150, %v150
    %v187 = vmul.f32 %v153, %v153
    %v188 = vmul.f32 %v156, %v156
    %v189 = vmul.f32 %v159, %v159
    %v190 = vmul.f32 %v162, %v162
    %v191 = vmul.f32 %v165, %v165
    %v192 = vmul.f32 %v168, %v168
    %v193 = vadd.f32 %v185, %v186
    %v194 = vadd.f32 %v193, %v187
    %v195 = vadd.f32 %v194, %v188
    %v196 = vadd.f32 %v195, %v189
    %v197 = vadd.f32 %v196, %v190
    %v198 = vadd.f32 %v197, %v191
    %v199 = vadd.f32 %v198, %v192
    %v200 = vrot.slane %v199, 4
    %v201 = vadd.f32 %v199, %v200
    %v202 = vrot.slane %v201, 2
    %v203 = vadd.f32 %v201, %v202
    %v204 = vrot.slane %v203, 1
    %v205 = vadd.f32 %v203, %v204
    %v206 = vmul.f32 %v184, 0.015625
    %v207 = vmul.f32 %v205, 0.015625
    %v208 = vmul.f32 %v206, %v206
    %v209 = vsub.f32 %v207, %v208
    %v210 = vmax.f32 %v209, 0.0
    %v211 = vadd.f32 %v210, 1e-05
    %v212 = vrsqrt.pop %v211
    %v213 = vmul.f32 %v212, %v211
    %v214 = vmul.f32 %v213, %v212
    %v215 = vmul.f32 0.5, %v214
    %v216 = vsub.f32 1.5, %v215
    %v217 = vmul.f32 %v212, %v216
    %vm218 = vweird.f32 %v211
    %vm219 = vweird.f32 %v212
    %vm220 = vmor %vm218, %vm219
    %v221 = vsel %vm220, %v212, %v217
    %v222 = vmul.f32 %v170, %v221
    %v223 = vmul.f32 %v206, %v222
    %v224 = vsub.f32 %v171, %v223
    %v226 = vperm.slane %v222, 0
    %v228 = vmul.f32 %v147, %v226
    %v229 = vmul.f32 %v150, %v226
    %v230 = vmul.f32 %v153, %v226
    %v231 = vmul.f32 %v156, %v226
    %v232 = vmul.f32 %v159, %v226
    %v233 = vmul.f32 %v162, %v226
    %v234 = vmul.f32 %v165, %v226
    %v235 = vmul.f32 %v168, %v226
    %v237 = vperm.slane %v224, 0
    %v239 = vadd.f32 %v228, %v237
    %v240 = vadd.f32 %v229, %v237
    %v241 = vadd.f32 %v230, %v237
    %v242 = vadd.f32 %v231, %v237
    %v243 = vadd.f32 %v232, %v237
    %v244 = vadd.f32 %v233, %v237
    %v245 = vadd.f32 %v234, %v237
    %v246 = vadd.f32 %v235, %v237
    %v247 = vmax.f32 %v239, 0.0
    %v248 = vmax.f32 %v240, 0.0
    %v249 = vmax.f32 %v241, 0.0
    %v250 = vmax.f32 %v242, 0.0
    %v251 = vmax.f32 %v243, 0.0
    %v252 = vmax.f32 %v244, 0.0
    %v253 = vmax.f32 %v245, 0.0
    %v254 = vmax.f32 %v246, 0.0
    %v255 = vld [vmem:[#allocation7] sm:$0xff]
    %v256 = vld [vmem:[#allocation7 + $0x8] sm:$0xff]
    %v257 = vld [vmem:[#allocation7 + $0x10] sm:$0xff]
    %v258 = vld [vmem:[#allocation7 + $0x18] sm:$0xff]
    %v259 = vld [vmem:[#allocation7 + $0x20] sm:$0xff]
    %v260 = vld [vmem:[#allocation7 + $0x28] sm:$0xff]
    %v261 = vld [vmem:[#allocation7 + $0x30] sm:$0xff]
    %v262 = vld [vmem:[#allocation7 + $0x38] sm:$0xff]
    %v263 = vld [vmem:[#allocation7 + $0x40] sm:$0xff]
    %v264 = vld [vmem:[#allocation7 + $0x48] sm:$0xff]
    %v265 = vld [vmem:[#allocation7 + $0x50] sm:$0xff]
    %v266 = vld [vmem:[#allocation7 + $0x58] sm:$0xff]
    %v267 = vld [vmem:[#allocation7 + $0x60] sm:$0xff]
    %v268 = vld [vmem:[#allocation7 + $0x68] sm:$0xff]
    %v269 = vld [vmem:[#allocation7 + $0x70] sm:$0xff]
    %v270 = vld [vmem:[#allocation7 + $0x78] sm:$0xff]
    %271 = vmatpush.msra.mxu0 %v270
    %272 = vmatpush.msra.mxu0 %v269
    %273 = vmatpush.msra.mxu0 %v268
    %274 = vmatpush.msra.mxu0 %v267
    %275 = vmatpush.msra.mxu0 %v266
    %276 = vmatpush.msra.mxu0 %v265
    %277 = vmatpush.msra.mxu0 %v264
    %278 = vmatpush.msra.mxu0 %v263
    %279 = vmatpush.msra.mxu0 %v262
    %280 = vmatpush.msra.mxu0 %v261
    %281 = vmatpush.msra.mxu0 %v260
    %282 = vmatpush.msra.mxu0 %v259
    %283 = vmatpush.msra.mxu0 %v258
    %284 = vmatpush.msra.mxu0 %v257
    %285 = vmatpush.msra.mxu0 %v256
    %286 = vmatpush.msra.mxu0 %v255
    %287 = vmatmul.f32.gmra.mxu0 %v247
    %v288 = vpop.f32.mrf.mxu0
    %v289 = vadd.f32 0.0, %v288
    %290 = vmatmul.f32.gmra.mxu0 %v248
    %v291 = vpop.f32.mrf.mxu0
    %v292 = vadd.f32 0.0, %v291
    %293 = vmatmul.f32.gmra.mxu0 %v249
    %v294 = vpop.f32.mrf.mxu0
    %v295 = vadd.f32 0.0, %v294
    %296 = vmatmul.f32.gmra.mxu0 %v250
    %v297 = vpop.f32.mrf.mxu0
    %v298 = vadd.f32 0.0, %v297
    %299 = vmatmul.f32.gmra.mxu0 %v251
    %v300 = vpop.f32.mrf.mxu0
    %v301 = vadd.f32 0.0, %v300
    %302 = vmatmul.f32.gmra.mxu0 %v252
    %v303 = vpop.f32.mrf.mxu0
    %v304 = vadd.f32 0.0, %v303
    %305 = vmatmul.f32.gmra.mxu0 %v253
    %v306 = vpop.f32.mrf.mxu0
    %v307 = vadd.f32 0.0, %v306
    %308 = vmatmul.f32.gmra.mxu0 %v254
    %v309 = vpop.f32.mrf.mxu0
    %v310 = vadd.f32 0.0, %v309
    %311 = vdwg.mxu0
    %s312 = scalar_lea.vmem [#allocation8], 1
    %v313 = vld [vmem:[%s312] sm:$0x1]
    %s314 = scalar_lea.vmem %s4, 1
    %v315 = vld [vmem:[%s314] sm:$0x1]
    %v316 = vadd.f32 %v289, %v292
    %v317 = vadd.f32 %v316, %v295
    %v318 = vadd.f32 %v317, %v298
    %v319 = vadd.f32 %v318, %v301
    %v320 = vadd.f32 %v319, %v304
    %v321 = vadd.f32 %v320, %v307
    %v322 = vadd.f32 %v321, %v310
    %v323 = vrot.slane %v322, 4
    %v324 = vadd.f32 %v322, %v323
    %v325 = vrot.slane %v324, 2
    %v326 = vadd.f32 %v324, %v325
    %v327 = vrot.slane %v326, 1
    %v328 = vadd.f32 %v326, %v327
    %v329 = vmul.f32 %v289, %v289
    %v330 = vmul.f32 %v292, %v292
    %v331 = vmul.f32 %v295, %v295
    %v332 = vmul.f32 %v298, %v298
    %v333 = vmul.f32 %v301, %v301
    %v334 = vmul.f32 %v304, %v304
    %v335 = vmul.f32 %v307, %v307
    %v336 = vmul.f32 %v310, %v310
    %v337 = vadd.f32 %v329, %v330
    %v338 = vadd.f32 %v337, %v331
    %v339 = vadd.f32 %v338, %v332
    %v340 = vadd.f32 %v339, %v333
    %v341 = vadd.f32 %v340, %v334
    %v342 = vadd.f32 %v341, %v335
    %v343 = vadd.f32 %v342, %v336
    %v344 = vrot.slane %v343, 4
    %v345 = vadd.f32 %v343, %v344
    %v346 = vrot.slane %v345, 2
    %v347 = vadd.f32 %v345, %v346
    %v348 = vrot.slane %v347, 1
    %v349 = vadd.f32 %v347, %v348
    %v350 = vmul.f32 %v328, 0.015625
    %v351 = vmul.f32 %v349, 0.015625
    %v352 = vmul.f32 %v350, %v350
    %v353 = vsub.f32 %v351, %v352
    %v354 = vmax.f32 %v353, 0.0
    %v355 = vadd.f32 %v354, 1e-05
    %v356 = vrsqrt.pop %v355
    %v357 = vmul.f32 %v356, %v355
    %v358 = vmul.f32 %v357, %v356
    %v359 = vmul.f32 0.5, %v358
    %v360 = vsub.f32 1.5, %v359
    %v361 = vmul.f32 %v356, %v360
    %vm362 = vweird.f32 %v355
    %vm363 = vweird.f32 %v356
    %vm364 = vmor %vm362, %vm363
    %v365 = vsel %vm364, %v356, %v361
    %v366 = vmul.f32 %v313, %v365
    %v367 = vmul.f32 %v350, %v366
    %v368 = vsub.f32 %v315, %v367
    %v370 = vperm.slane %v366, 0
    %v372 = vmul.f32 %v289, %v370
    %v373 = vmul.f32 %v292, %v370
    %v374 = vmul.f32 %v295, %v370
    %v375 = vmul.f32 %v298, %v370
    %v376 = vmul.f32 %v301, %v370
    %v377 = vmul.f32 %v304, %v370
    %v378 = vmul.f32 %v307, %v370
    %v379 = vmul.f32 %v310, %v370
    %v381 = vperm.slane %v368, 0
    %v383 = vadd.f32 %v372, %v381
    %v384 = vadd.f32 %v373, %v381
    %v385 = vadd.f32 %v374, %v381
    %v386 = vadd.f32 %v375, %v381
    %v387 = vadd.f32 %v376, %v381
    %v388 = vadd.f32 %v377, %v381
    %v389 = vadd.f32 %v378, %v381
    %v390 = vadd.f32 %v379, %v381
    %v391 = vmax.f32 %v383, 0.0
    %v392 = vmax.f32 %v384, 0.0
    %v393 = vmax.f32 %v385, 0.0
    %v394 = vmax.f32 %v386, 0.0
    %v395 = vmax.f32 %v387, 0.0
    %v396 = vmax.f32 %v388, 0.0
    %v397 = vmax.f32 %v389, 0.0
    %v398 = vmax.f32 %v390, 0.0
    %s399 = scalar_lea.vmem [#allocation7], 128
    %v400 = vld [vmem:[%s399] sm:$0xff]
    %v401 = vld [vmem:[%s399 + $0x8] sm:$0xff]
    %v402 = vld [vmem:[%s399 + $0x10] sm:$0xff]
    %v403 = vld [vmem:[%s399 + $0x18] sm:$0xff]
    %v404 = vld [vmem:[%s399 + $0x20] sm:$0xff]
    %v405 = vld [vmem:[%s399 + $0x28] sm:$0xff]
    %v406 = vld [vmem:[%s399 + $0x30] sm:$0xff]
    %v407 = vld [vmem:[%s399 + $0x38] sm:$0xff]
    %v408 = vld [vmem:[%s399 + $0x40] sm:$0xff]
    %v409 = vld [vmem:[%s399 + $0x48] sm:$0xff]
    %v410 = vld [vmem:[%s399 + $0x50] sm:$0xff]
    %v411 = vld [vmem:[%s399 + $0x58] sm:$0xff]
    %v412 = vld [vmem:[%s399 + $0x60] sm:$0xff]
    %v413 = vld [vmem:[%s399 + $0x68] sm:$0xff]
    %v414 = vld [vmem:[%s399 + $0x70] sm:$0xff]
    %v415 = vld [vmem:[%s399 + $0x78] sm:$0xff]
    %416 = vmatpush.msra.mxu0 %v415
    %417 = vmatpush.msra.mxu0 %v414
    %418 = vmatpush.msra.mxu0 %v413
    %419 = vmatpush.msra.mxu0 %v412
    %420 = vmatpush.msra.mxu0 %v411
    %421 = vmatpush.msra.mxu0 %v410
    %422 = vmatpush.msra.mxu0 %v409
    %423 = vmatpush.msra.mxu0 %v408
    %424 = vmatpush.msra.mxu0 %v407
    %425 = vmatpush.msra.mxu0 %v406
    %426 = vmatpush.msra.mxu0 %v405
    %427 = vmatpush.msra.mxu0 %v404
    %428 = vmatpush.msra.mxu0 %v403
    %429 = vmatpush.msra.mxu0 %v402
    %430 = vmatpush.msra.mxu0 %v401
    %431 = vmatpush.msra.mxu0 %v400
    %432 = vmatmul.f32.gmra.mxu0 %v391
    %v433 = vpop.f32.mrf.mxu0
    %v434 = vadd.f32 0.0, %v433
    %435 = vmatmul.f32.gmra.mxu0 %v392
    %v436 = vpop.f32.mrf.mxu0
    %v437 = vadd.f32 0.0, %v436
    %438 = vmatmul.f32.gmra.mxu0 %v393
    %v439 = vpop.f32.mrf.mxu0
    %v440 = vadd.f32 0.0, %v439
    %441 = vmatmul.f32.gmra.mxu0 %v394
    %v442 = vpop.f32.mrf.mxu0
    %v443 = vadd.f32 0.0, %v442
    %444 = vmatmul.f32.gmra.mxu0 %v395
    %v445 = vpop.f32.mrf.mxu0
    %v446 = vadd.f32 0.0, %v445
    %447 = vmatmul.f32.gmra.mxu0 %v396
    %v448 = vpop.f32.mrf.mxu0
    %v449 = vadd.f32 0.0, %v448
    %450 = vmatmul.f32.gmra.mxu0 %v397
    %v451 = vpop.f32.mrf.mxu0
    %v452 = vadd.f32 0.0, %v451
    %453 = vmatmul.f32.gmra.mxu0 %v398
    %v454 = vpop.f32.mrf.mxu0
    %v455 = vadd.f32 0.0, %v454
    %456 = vdwg.mxu0
    %s457 = scalar_lea.vmem [#allocation8], 2
    %v458 = vld [vmem:[%s457] sm:$0x1]
    %s459 = scalar_lea.vmem %s4, 2
    %v460 = vld [vmem:[%s459] sm:$0x1]
    %v461 = vadd.f32 %v434, %v437
    %v462 = vadd.f32 %v461, %v440
    %v463 = vadd.f32 %v462, %v443
    %v464 = vadd.f32 %v463, %v446
    %v465 = vadd.f32 %v464, %v449
    %v466 = vadd.f32 %v465, %v452
    %v467 = vadd.f32 %v466, %v455
    %v468 = vrot.slane %v467, 4
    %v469 = vadd.f32 %v467, %v468
    %v470 = vrot.slane %v469, 2
    %v471 = vadd.f32 %v469, %v470
    %v472 = vrot.slane %v471, 1
    %v473 = vadd.f32 %v471, %v472
    %v474 = vmul.f32 %v434, %v434
    %v475 = vmul.f32 %v437, %v437
    %v476 = vmul.f32 %v440, %v440
    %v477 = vmul.f32 %v443, %v443
    %v478 = vmul.f32 %v446, %v446
    %v479 = vmul.f32 %v449, %v449
    %v480 = vmul.f32 %v452, %v452
    %v481 = vmul.f32 %v455, %v455
    %v482 = vadd.f32 %v474, %v475
    %v483 = vadd.f32 %v482, %v476
    %v484 = vadd.f32 %v483, %v477
    %v485 = vadd.f32 %v484, %v478
    %v486 = vadd.f32 %v485, %v479
    %v487 = vadd.f32 %v486, %v480
    %v488 = vadd.f32 %v487, %v481
    %v489 = vrot.slane %v488, 4
    %v490 = vadd.f32 %v488, %v489
    %v491 = vrot.slane %v490, 2
    %v492 = vadd.f32 %v490, %v491
    %v493 = vrot.slane %v492, 1
    %v494 = vadd.f32 %v492, %v493
    %v495 = vmul.f32 %v473, 0.015625
    %v496 = vmul.f32 %v494, 0.015625
    %v497 = vmul.f32 %v495, %v495
    %v498 = vsub.f32 %v496, %v497
    %v499 = vmax.f32 %v498, 0.0
    %v500 = vadd.f32 %v499, 1e-05
    %v501 = vrsqrt.pop %v500
    %v502 = vmul.f32 %v501, %v500
    %v503 = vmul.f32 %v502, %v501
    %v504 = vmul.f32 0.5, %v503
    %v505 = vsub.f32 1.5, %v504
    %v506 = vmul.f32 %v501, %v505
    %vm507 = vweird.f32 %v500
    %vm508 = vweird.f32 %v501
    %vm509 = vmor %vm507, %vm508
    %v510 = vsel %vm509, %v501, %v506
    %v511 = vmul.f32 %v458, %v510
    %v512 = vmul.f32 %v495, %v511
    %v513 = vsub.f32 %v460, %v512
    %v515 = vperm.slane %v511, 0
    %v517 = vmul.f32 %v434, %v515
    %v518 = vmul.f32 %v437, %v515
    %v519 = vmul.f32 %v440, %v515
    %v520 = vmul.f32 %v443, %v515
    %v521 = vmul.f32 %v446, %v515
    %v522 = vmul.f32 %v449, %v515
    %v523 = vmul.f32 %v452, %v515
    %v524 = vmul.f32 %v455, %v515
    %v526 = vperm.slane %v513, 0
    %v528 = vadd.f32 %v517, %v526
    %v529 = vadd.f32 %v518, %v526
    %v530 = vadd.f32 %v519, %v526
    %v531 = vadd.f32 %v520, %v526
    %v532 = vadd.f32 %v521, %v526
    %v533 = vadd.f32 %v522, %v526
    %v534 = vadd.f32 %v523, %v526
    %v535 = vadd.f32 %v524, %v526
    %v536 = vmax.f32 %v528, 0.0
    %v537 = vmax.f32 %v529, 0.0
    %v538 = vmax.f32 %v530, 0.0
    %v539 = vmax.f32 %v531, 0.0
    %v540 = vmax.f32 %v532, 0.0
    %v541 = vmax.f32 %v533, 0.0
    %v542 = vmax.f32 %v534, 0.0
    %v543 = vmax.f32 %v535, 0.0
    %v544 = vld [vmem:[#allocation10] sm:$0xff]
    %v545 = vld [vmem:[#allocation10 + $0x8] sm:$0xff]
    %v546 = vld [vmem:[#allocation10 + $0x10] sm:$0xff]
    %v547 = vld [vmem:[#allocation10 + $0x18] sm:$0xff]
    %v548 = vld [vmem:[#allocation10 + $0x20] sm:$0xff]
    %v549 = vld [vmem:[#allocation10 + $0x28] sm:$0xff]
    %v550 = vld [vmem:[#allocation10 + $0x30] sm:$0xff]
    %v551 = vld [vmem:[#allocation10 + $0x38] sm:$0xff]
    %v552 = vld [vmem:[#allocation10 + $0x40] sm:$0xff]
    %v553 = vld [vmem:[#allocation10 + $0x48] sm:$0xff]
    %v554 = vld [vmem:[#allocation10 + $0x50] sm:$0xff]
    %v555 = vld [vmem:[#allocation10 + $0x58] sm:$0xff]
    %v556 = vld [vmem:[#allocation10 + $0x60] sm:$0xff]
    %v557 = vld [vmem:[#allocation10 + $0x68] sm:$0xff]
    %v558 = vld [vmem:[#allocation10 + $0x70] sm:$0xff]
    %v559 = vld [vmem:[#allocation10 + $0x78] sm:$0xff]
    %v560 = vld [vmem:[%s6] sm:$0x1]
    %v562 = vperm.slane %v560, 0
    %564 = vmatpush.msra.mxu0 %v559
    %565 = vmatpush.msra.mxu0 %v558
    %566 = vmatpush.msra.mxu0 %v557
    %567 = vmatpush.msra.mxu0 %v556
    %568 = vmatpush.msra.mxu0 %v555
    %569 = vmatpush.msra.mxu0 %v554
    %570 = vmatpush.msra.mxu0 %v553
    %571 = vmatpush.msra.mxu0 %v552
    %572 = vmatpush.msra.mxu0 %v551
    %573 = vmatpush.msra.mxu0 %v550
    %574 = vmatpush.msra.mxu0 %v549
    %575 = vmatpush.msra.mxu0 %v548
    %576 = vmatpush.msra.mxu0 %v547
    %577 = vmatpush.msra.mxu0 %v546
    %578 = vmatpush.msra.mxu0 %v545
    %579 = vmatpush.msra.mxu0 %v544
    %580 = vmatmul.f32.gmra.mxu0 %v536
    %v581 = vpop.f32.mrf.mxu0
    %v582 = vadd.f32 %v562, %v581
    %583 = vmatmul.f32.gmra.mxu0 %v537
    %v584 = vpop.f32.mrf.mxu0
    %v585 = vadd.f32 %v562, %v584
    %586 = vmatmul.f32.gmra.mxu0 %v538
    %v587 = vpop.f32.mrf.mxu0
    %v588 = vadd.f32 %v562, %v587
    %589 = vmatmul.f32.gmra.mxu0 %v539
    %v590 = vpop.f32.mrf.mxu0
    %v591 = vadd.f32 %v562, %v590
    %592 = vmatmul.f32.gmra.mxu0 %v540
    %v593 = vpop.f32.mrf.mxu0
    %v594 = vadd.f32 %v562, %v593
    %595 = vmatmul.f32.gmra.mxu0 %v541
    %v596 = vpop.f32.mrf.mxu0
    %v597 = vadd.f32 %v562, %v596
    %598 = vmatmul.f32.gmra.mxu0 %v542
    %v599 = vpop.f32.mrf.mxu0
    %v600 = vadd.f32 %v562, %v599
    %601 = vmatmul.f32.gmra.mxu0 %v543
    %v602 = vpop.f32.mrf.mxu0
    %v603 = vadd.f32 %v562, %v602
    %604 = vdwg.mxu0
    %v605 = vxor.u32 %v582, 2147483648
    %v606 = vxor.u32 %v585, 2147483648
    %v607 = vxor.u32 %v588, 2147483648
    %v608 = vxor.u32 %v591, 2147483648
    %v609 = vxor.u32 %v594, 2147483648
    %v610 = vxor.u32 %v597, 2147483648
    %v611 = vxor.u32 %v600, 2147483648
    %v612 = vxor.u32 %v603, 2147483648
    %v613 = vmul.f32 %v605, 1.442695
    %v614 = vpow.pop %v613
    %v615 = vmul.f32 %v606, 1.442695
    %v616 = vpow.pop %v615
    %v617 = vmul.f32 %v607, 1.442695
    %v618 = vpow.pop %v617
    %v619 = vmul.f32 %v608, 1.442695
    %v620 = vpow.pop %v619
    %v621 = vmul.f32 %v609, 1.442695
    %v622 = vpow.pop %v621
    %v623 = vmul.f32 %v610, 1.442695
    %v624 = vpow.pop %v623
    %v625 = vmul.f32 %v611, 1.442695
    %v626 = vpow.pop %v625
    %v627 = vmul.f32 %v612, 1.442695
    %v628 = vpow.pop %v627
    %v629 = vadd.f32 %v614, 1.0
    %v630 = vadd.f32 %v616, 1.0
    %v631 = vadd.f32 %v618, 1.0
    %v632 = vadd.f32 %v620, 1.0
    %v633 = vadd.f32 %v622, 1.0
    %v634 = vadd.f32 %v624, 1.0
    %v635 = vadd.f32 %v626, 1.0
    %v636 = vadd.f32 %v628, 1.0
    %v637 = vrcp.pop %v629
    %v638 = vmul.f32 %v629, %v637
    %v639 = vsub.f32 1.0, %v638
    %v640 = vmul.f32 %v637, %v639
    %v641 = vadd.f32 %v637, %v640
    %vm642 = vweird.f32 %v629
    %vm643 = vweird.f32 %v637
    %vm644 = vmor %vm642, %vm643
    %v645 = vsel %vm644, %v637, %v641
    %v646 = vand.u32 2147483647, %v629
    %vm647 = vcmp.eq.f32.partialorder %v646, 8.507059e+37
    %v648 = vand.u32 %v629, 2147483648
    %v649 = vor.u32 1.1754944e-38, %v648
    %v650 = vsel %vm647, %v649, %v645
    %v651 = vmul.f32 1.0, %v650
    %v652 = vrcp.pop %v630
    %v653 = vmul.f32 %v630, %v652
    %v654 = vsub.f32 1.0, %v653
    %v655 = vmul.f32 %v652, %v654
    %v656 = vadd.f32 %v652, %v655
    %vm657 = vweird.f32 %v630
    %vm658 = vweird.f32 %v652
    %vm659 = vmor %vm657, %vm658
    %v660 = vsel %vm659, %v652, %v656
    %v661 = vand.u32 2147483647, %v630
    %vm662 = vcmp.eq.f32.partialorder %v661, 8.507059e+37
    %v663 = vand.u32 %v630, 2147483648
    %v664 = vor.u32 1.1754944e-38, %v663
    %v665 = vsel %vm662, %v664, %v660
    %v666 = vmul.f32 1.0, %v665
    %v667 = vrcp.pop %v631
    %v668 = vmul.f32 %v631, %v667
    %v669 = vsub.f32 1.0, %v668
    %v670 = vmul.f32 %v667, %v669
    %v671 = vadd.f32 %v667, %v670
    %vm672 = vweird.f32 %v631
    %vm673 = vweird.f32 %v667
    %vm674 = vmor %vm672, %vm673
    %v675 = vsel %vm674, %v667, %v671
    %v676 = vand.u32 2147483647, %v631
    %vm677 = vcmp.eq.f32.partialorder %v676, 8.507059e+37
    %v678 = vand.u32 %v631, 2147483648
    %v679 = vor.u32 1.1754944e-38, %v678
    %v680 = vsel %vm677, %v679, %v675
    %v681 = vmul.f32 1.0, %v680
    %v682 = vrcp.pop %v632
    %v683 = vmul.f32 %v632, %v682
    %v684 = vsub.f32 1.0, %v683
    %v685 = vmul.f32 %v682, %v684
    %v686 = vadd.f32 %v682, %v685
    %vm687 = vweird.f32 %v632
    %vm688 = vweird.f32 %v682
    %vm689 = vmor %vm687, %vm688
    %v690 = vsel %vm689, %v682, %v686
    %v691 = vand.u32 2147483647, %v632
    %vm692 = vcmp.eq.f32.partialorder %v691, 8.507059e+37
    %v693 = vand.u32 %v632, 2147483648
    %v694 = vor.u32 1.1754944e-38, %v693
    %v695 = vsel %vm692, %v694, %v690
    %v696 = vmul.f32 1.0, %v695
    %v697 = vrcp.pop %v633
    %v698 = vmul.f32 %v633, %v697
    %v699 = vsub.f32 1.0, %v698
    %v700 = vmul.f32 %v697, %v699
    %v701 = vadd.f32 %v697, %v700
    %vm702 = vweird.f32 %v633
    %vm703 = vweird.f32 %v697
    %vm704 = vmor %vm702, %vm703
    %v705 = vsel %vm704, %v697, %v701
    %v706 = vand.u32 2147483647, %v633
    %vm707 = vcmp.eq.f32.partialorder %v706, 8.507059e+37
    %v708 = vand.u32 %v633, 2147483648
    %v709 = vor.u32 1.1754944e-38, %v708
    %v710 = vsel %vm707, %v709, %v705
    %v711 = vmul.f32 1.0, %v710
    %v712 = vrcp.pop %v634
    %v713 = vmul.f32 %v634, %v712
    %v714 = vsub.f32 1.0, %v713
    %v715 = vmul.f32 %v712, %v714
    %v716 = vadd.f32 %v712, %v715
    %vm717 = vweird.f32 %v634
    %vm718 = vweird.f32 %v712
    %vm719 = vmor %vm717, %vm718
    %v720 = vsel %vm719, %v712, %v716
    %v721 = vand.u32 2147483647, %v634
    %vm722 = vcmp.eq.f32.partialorder %v721, 8.507059e+37
    %v723 = vand.u32 %v634, 2147483648
    %v724 = vor.u32 1.1754944e-38, %v723
    %v725 = vsel %vm722, %v724, %v720
    %v726 = vmul.f32 1.0, %v725
    %v727 = vrcp.pop %v635
    %v728 = vmul.f32 %v635, %v727
    %v729 = vsub.f32 1.0, %v728
    %v730 = vmul.f32 %v727, %v729
    %v731 = vadd.f32 %v727, %v730
    %vm732 = vweird.f32 %v635
    %vm733 = vweird.f32 %v727
    %vm734 = vmor %vm732, %vm733
    %v735 = vsel %vm734, %v727, %v731
    %v736 = vand.u32 2147483647, %v635
    %vm737 = vcmp.eq.f32.partialorder %v736, 8.507059e+37
    %v738 = vand.u32 %v635, 2147483648
    %v739 = vor.u32 1.1754944e-38, %v738
    %v740 = vsel %vm737, %v739, %v735
    %v741 = vmul.f32 1.0, %v740
    %v742 = vrcp.pop %v636
    %v743 = vmul.f32 %v636, %v742
    %v744 = vsub.f32 1.0, %v743
    %v745 = vmul.f32 %v742, %v744
    %v746 = vadd.f32 %v742, %v745
    %vm747 = vweird.f32 %v636
    %vm748 = vweird.f32 %v742
    %vm749 = vmor %vm747, %vm748
    %v750 = vsel %vm749, %v742, %v746
    %v751 = vand.u32 2147483647, %v636
    %vm752 = vcmp.eq.f32.partialorder %v751, 8.507059e+37
    %v753 = vand.u32 %v636, 2147483648
    %v754 = vor.u32 1.1754944e-38, %v753
    %v755 = vsel %vm752, %v754, %v750
    %v756 = vmul.f32 1.0, %v755
    %757 = vst [vmem:[#allocation11] sm:$0xff] %v651
    %758 = vst [vmem:[#allocation11 + $0x8] sm:$0xff] %v666
    %759 = vst [vmem:[#allocation11 + $0x10] sm:$0xff] %v681
    %760 = vst [vmem:[#allocation11 + $0x18] sm:$0xff] %v696
    %761 = vst [vmem:[#allocation11 + $0x20] sm:$0xff] %v711
    %762 = vst [vmem:[#allocation11 + $0x28] sm:$0xff] %v726
    %763 = vst [vmem:[#allocation11 + $0x30] sm:$0xff] %v741
    %764 = vst [vmem:[#allocation11 + $0x38] sm:$0xff] %v756
    // Predicated region
    $region50: #{tpu_custom_call.1} parent=1 // pred_check
      _
    $region51: #{tpu_custom_call.1} parent=1 // pred_check_branch
      %766 = sbr.rel (0) target = $region53
    $region52: #{tpu_custom_call.1} parent=1 // pred_region
      %768 = vsyncadd [#allocation4], 0
      %s769 = sshll.u32 [#allocation11], 4
      %s770 = int_to_ptr.vmem [resolvable:$true] %s769
      %s771 = sshll.u32 %s7, 4
      %s772 = int_to_ptr.hbm [resolvable:$true] %s771
      %777 = dma.vmem_to_hbm [thread:$0]  %s770, 1024, %s772, [#allocation4], 128, 128, 8
    $region53: #{tpu_custom_call.1} parent=1 // pred_fallthru
      _
    // Predicated region
    $region54: #{tpu_custom_call.1} parent=1 // pred_check
      _
    $region55: #{tpu_custom_call.1} parent=1 // pred_check_branch
      %779 = sbr.rel (0) target = $region57
    $region56: #{tpu_custom_call.1} parent=1 // pred_region
      %781 = dma.done [#allocation4], 1024
    $region57: #{tpu_custom_call.1} parent=1 // pred_fallthru
      _
    %782 = vsyncpa [#allocation3], 1
    %783 = vsyncpa [#allocation6], 1
    %784 = vsyncpa [#allocation9], 1
    %785 = vsyncpa [#allocation4], 1

</llo_original>
